<compile_context>
chip_gen: v6e
topology: v6e:2x2x1
jax: 0.10.0
libtpu: 0.0.40
codegen_flags: <defaults>
</compile_context>

<pallas_src>
import jax
import jax.numpy as jnp
from jax.experimental import pallas as pl
from jax.experimental.pallas import tpu as pltpu

EPS = 1e-5                  # BatchNorm eps (PyTorch default)
NEG_SLOPE = 0.2             # LeakyReLU negative slope
MXU_DTYPE = jnp.bfloat16    # streaming / matmul operand dtype (f32 accumulation)

_LANE = 128


def _round_up(x, m):
    return (x + m - 1) // m * m


def _vmem_limit_bytes():
    # Generation-aware scoped-VMEM limit: ~3/4 of physical capacity, capped at
    # 100 MiB.  Falls back to a 64 MiB assumption (safe on every generation).
    cap = 64 * 1024 * 1024
    try:
        info = pltpu.get_tpu_info()
        cap = int(getattr(info, "vmem_capacity_bytes", cap) or cap)
    except Exception:
        pass
    return int(min(cap * 3 // 4, 100 * 1024 * 1024))


_VMEM_LIMIT = _vmem_limit_bytes()
_BLOCK_BUDGET = _VMEM_LIMIT // 2     # budget for streamed blocks + in-kernel temps


def _blk_bytes(shape, dtype_bytes):
    """VMEM bytes of one block including lane (128) / sublane (8 f32, 16 bf16) padding."""
    s = list(shape)
    if len(s) == 1:
        s = [1] + s
    sub = 8 if dtype_bytes >= 4 else 16
    s[-1] = _round_up(s[-1], _LANE)
    s[-2] = _round_up(s[-2], sub)
    n = 1
    for d in s:
        n *= d
    return n * dtype_bytes


def _pick_rows(m, bytes_fn, budget=_BLOCK_BUDGET):
    """Largest row-tile (multiple of 16, <= padded m) whose padded VMEM footprint fits."""
    cap = _round_up(max(m, 16), 16)
    for tm in (min(cap, 1024), 512, 384, 256, 128, 64, 32, 16):
        if tm > cap or tm % 16:
            continue
        if bytes_fn(tm) <= budget:
            return tm
    return 16


def _plan_split(m, tm):
    """Pad m so the row tiles split evenly across a 2-way core-parallel axis."""
    nt = -(-m // tm)
    nt = _round_up(nt, 2)
    return nt * tm, nt // 2      # (padded rows, tiles per core)


# ----------------------------- Pallas kernels ------------------------------

def _pdist_kernel(xq_ref, x_ref, a2_ref, d_ref):
    # xq: (1, tq, C) query rows; x: (1, N, C) all points; a2: (1, 1, N) squared norms.
    # d[i, j] = -||x_i - x_j||^2 (so top_k picks nearest neighbours).
    xq = xq_ref[0]                                                   # (tq, C)
    xa = x_ref[0]                                                    # (N, C)
    gram = jax.lax.dot_general(xq, xa, (((1,), (1,)), ((), ())),
                               preferred_element_type=jnp.float32)   # (tq, N)
    q2 = jnp.sum(xq * xq, axis=-1, keepdims=True)                    # (tq, 1)
    d_ref[0] = 2.0 * gram - q2 - a2_ref[0]                           # (1, N) broadcast


def _edge_stats_kernel(nbr_ref, ctr_ref, wt_ref, wd_ref, ymax_ref, sum_ref, sq_ref):
    # Single streaming pass over the k-expanded neighbours:
    #   y_j = nbr_j @ W_top + ctr @ (W_bot - W_top)   (bf16 operands, f32 accum)
    # accumulates per-channel sum / sumsq and writes max_j y_j (pre-BN).
    # max-over-k commutes with the (monotone) BN-affine + LeakyReLU applied later.
    @pl.when(pl.program_id(1) == 0)
    def _():
        sum_ref[...] = jnp.zeros_like(sum_ref)
        sq_ref[...] = jnp.zeros_like(sq_ref)

    k = nbr_ref.shape[0]
    wt = wt_ref[...]
    ctr_term = jnp.dot(ctr_ref[...], wd_ref[...],
                       preferred_element_type=jnp.float32)            # (tm, C)

    s = jnp.zeros((1, sum_ref.shape[-1]), jnp.float32)
    q = jnp.zeros((1, sq_ref.shape[-1]), jnp.float32)
    m = None
    # k is small (4-20); unrolled.  Each dot has M = tm >= 256 rows in realistic
    # configs, which keeps the MXU fed without an in-kernel (k*tm, F) reshape.
    for j in range(k):
        y = jnp.dot(nbr_ref[j], wt, preferred_element_type=jnp.float32) + ctr_term
        s = s + jnp.sum(y, axis=0, keepdims=True)
        q = q + jnp.sum(y * y, axis=0, keepdims=True)
        m = y if m is None else jnp.maximum(m, y)
    sum_ref[...] += s.reshape(1, 1, -1)
    sq_ref[...] += q.reshape(1, 1, -1)
    ymax_ref[...] = m


def _lin_stats_kernel(x_ref, w_ref, y_ref, sum_ref, sq_ref):
    # Conv1d(k=1) matmul done ONCE; y is written (bf16) so the BN pass is elementwise.
    @pl.when(pl.program_id(1) == 0)
    def _():
        sum_ref[...] = jnp.zeros_like(sum_ref)
        sq_ref[...] = jnp.zeros_like(sq_ref)
    y = jnp.dot(x_ref[...], w_ref[...], preferred_element_type=jnp.float32)
    sum_ref[...] += jnp.sum(y, axis=0, keepdims=True).reshape(1, 1, -1)
    sq_ref[...] += jnp.sum(y * y, axis=0, keepdims=True).reshape(1, 1, -1)
    y_ref[...] = y.astype(y_ref.dtype)


def _bn_act_kernel(y_ref, scale_ref, shift_ref, o_ref):
    # Pure elementwise BN-normalize + LeakyReLU(0.2).  maximum(z, 0.2*z) == LeakyReLU.
    z = y_ref[...].astype(jnp.float32) * scale_ref[...] + shift_ref[...]
    o_ref[...] = jnp.maximum(z, NEG_SLOPE * z)


def _linear_bias_kernel(x_ref, w_ref, b_ref, o_ref):
    # Final Conv1d(64 -> out) with bias; kept in f32 (tiny output layer).
    o_ref[...] = jnp.dot(x_ref[...], w_ref[...],
                         preferred_element_type=jnp.float32) + b_ref[...]


# ----------------------------- kernel wrappers ------------------------------

def pairwise_neg_sqdist(x):
    B, N, C = x.shape
    a2 = jnp.sum(x * x, axis=-1).reshape(B, 1, N)

    def bytes_fn(tq):
        return (2 * (_blk_bytes((1, tq, C), 4) + _blk_bytes((1, tq, N), 4))
                + _blk_bytes((1, N, C), 4) + _blk_bytes((1, 1, N), 4)
                + 2 * _blk_bytes((tq, N), 4))

    tq = _pick_rows(N, bytes_fn)
    Nq = _round_up(N, tq)
    xq = x if Nq == N else jnp.pad(x, ((0, 0), (0, Nq - N), (0, 0)))

    d = pl.pallas_call(
        _pdist_kernel,
        out_shape=jax.ShapeDtypeStruct((B, Nq, N), jnp.float32),
        grid=(B, Nq // tq),
        in_specs=[pl.BlockSpec((1, tq, C), lambda b, i: (b, i, 0)),
                  pl.BlockSpec((1, N, C), lambda b, i: (b, 0, 0)),
                  pl.BlockSpec((1, 1, N), lambda b, i: (b, 0, 0))],
        out_specs=pl.BlockSpec((1, tq, N), lambda b, i: (b, i, 0)),
        compiler_params=pltpu.CompilerParams(
            dimension_semantics=("parallel", "parallel"),
            vmem_limit_bytes=_VMEM_LIMIT),
    )(xq, x, a2)
    return d[:, :N, :] if Nq != N else d


def edge_stats(nbr, ctr, wt, wd, tm, T2):
    k, Mp, F = nbr.shape
    C = wt.shape[1]
    return pl.pallas_call(
        _edge_stats_kernel,
        out_shape=(jax.ShapeDtypeStruct((Mp, C), jnp.float32),   # max_j y (pre-BN)
                   jax.ShapeDtypeStruct((2, 1, C), jnp.float32),  # per-core sum
                   jax.ShapeDtypeStruct((2, 1, C), jnp.float32)), # per-core sumsq
        grid=(2, T2),
        in_specs=[pl.BlockSpec((k, tm, F), lambda c, i: (0, c * T2 + i, 0)),
                  pl.BlockSpec((tm, F), lambda c, i: (c * T2 + i, 0)),
                  pl.BlockSpec((F, C), lambda c, i: (0, 0)),
                  pl.BlockSpec((F, C), lambda c, i: (0, 0))],
        out_specs=(pl.BlockSpec((tm, C), lambda c, i: (c * T2 + i, 0)),
                   pl.BlockSpec((1, 1, C), lambda c, i: (c, 0, 0)),
                   pl.BlockSpec((1, 1, C), lambda c, i: (c, 0, 0))),
        compiler_params=pltpu.CompilerParams(
            dimension_semantics=("parallel", "arbitrary"),
            vmem_limit_bytes=_VMEM_LIMIT),
    )(nbr, ctr, wt, wd)


def lin_stats(x2, w, tm, T2):
    Mp, F = x2.shape
    C = w.shape[1]
    return pl.pallas_call(
        _lin_stats_kernel,
        out_shape=(jax.ShapeDtypeStruct((Mp, C), MXU_DTYPE),
                   jax.ShapeDtypeStruct((2, 1, C), jnp.float32),
                   jax.ShapeDtypeStruct((2, 1, C), jnp.float32)),
        grid=(2, T2),
        in_specs=[pl.BlockSpec((tm, F), lambda c, i: (c * T2 + i, 0)),
                  pl.BlockSpec((F, C), lambda c, i: (0, 0))],
        out_specs=(pl.BlockSpec((tm, C), lambda c, i: (c * T2 + i, 0)),
                   pl.BlockSpec((1, 1, C), lambda c, i: (c, 0, 0)),
                   pl.BlockSpec((1, 1, C), lambda c, i: (c, 0, 0))),
        compiler_params=pltpu.CompilerParams(
            dimension_semantics=("parallel", "arbitrary"),
            vmem_limit_bytes=_VMEM_LIMIT),
    )(x2, w)


def bn_act(y, scale, shift, tm):
    Mp, C = y.shape
    return pl.pallas_call(
        _bn_act_kernel,
        out_shape=jax.ShapeDtypeStruct((Mp, C), jnp.float32),
        grid=(Mp // tm,),
        in_specs=[pl.BlockSpec((tm, C), lambda i: (i, 0)),
                  pl.BlockSpec((1, C), lambda i: (0, 0)),
                  pl.BlockSpec((1, C), lambda i: (0, 0))],
        out_specs=pl.BlockSpec((tm, C), lambda i: (i, 0)),
        compiler_params=pltpu.CompilerParams(
            dimension_semantics=("parallel",), vmem_limit_bytes=_VMEM_LIMIT),
    )(y, scale, shift)


def linear_bias(x2, w, b, tm):
    Mp, K = x2.shape
    C = w.shape[1]
    return pl.pallas_call(
        _linear_bias_kernel,
        out_shape=jax.ShapeDtypeStruct((Mp, C), jnp.float32),
        grid=(Mp // tm,),
        in_specs=[pl.BlockSpec((tm, K), lambda i: (i, 0)),
                  pl.BlockSpec((K, C), lambda i: (0, 0)),
                  pl.BlockSpec((1, C), lambda i: (0, 0))],
        out_specs=pl.BlockSpec((tm, C), lambda i: (i, 0)),
        compiler_params=pltpu.CompilerParams(
            dimension_semantics=("parallel",), vmem_limit_bytes=_VMEM_LIMIT),
    )(x2, w, b.reshape(1, C))


# ----------------------------- module forward ------------------------------

def gather_neighbors(x, k):
    # x: (B, N, F) channels-last f32.  Returns neighbour rows (k, B*N, F) and
    # centre rows (B*N, F), both bf16 (the MXU consumes bf16 anyway, so this
    # only halves HBM traffic — identical matmul results).
    B, N, F = x.shape
    d = pairwise_neg_sqdist(x)                            # (B, N, N) f32 (exact knn)
    # TODO(synk): fuse top-k into the distance kernel (running per-query top-k in
    # VMEM) to avoid materializing the (B, N, N) distance matrix in HBM.
    _, idx = jax.lax.top_k(d, k)                          # (B, N, k) nearest (incl. self)
    base = (jnp.arange(B, dtype=jnp.int32) * N)[:, None, None]
    flat_idx = (idx + base).transpose(2, 0, 1).reshape(k, B * N)
    x_flat = x.reshape(B * N, F).astype(MXU_DTYPE)
    # TODO(synk): replace this jnp.take with an in-kernel DMA gather driven by
    # scalar-prefetched indices to avoid the k-expanded HBM tensor entirely.
    nbr = jnp.take(x_flat, flat_idx, axis=0)              # (k, B*N, F) bf16
    return nbr, x_flat


def edge_convolution(x, w, k):
    # Conv2d(2F->C, 1x1, bias=False) on concat([nbr - ctr, ctr]) + BatchNorm2d
    # (train-mode batch stats, gamma=1 / beta=0) + LeakyReLU(0.2) + max over k.
    # Weight split: concat([nbr-ctr, ctr]) @ W = nbr @ W_top + ctr @ (W_bot - W_top).
    # Max over k is taken on the pre-BN y inside the stats pass (monotonicity).
    B, N, F = x.shape
    C = w.shape[1]
    M = B * N
    nbr, ctr = gather_neighbors(x, k)
    wt = w[:F].astype(MXU_DTYPE)
    wd = (w[F:] - w[:F]).astype(MXU_DTYPE)

    def bytes_fn(tm):
        return (2 * (_blk_bytes((k, tm, F), 2) + _blk_bytes((tm, F), 2)
                     + _blk_bytes((tm, C), 4))              # streamed, double-buffered
                + 2 * _blk_bytes((F, C), 2)                 # resident weights
                + 4 * _blk_bytes((1, C), 4)                 # sum/sq accumulators
                + 5 * _blk_bytes((tm, C), 4))               # in-kernel f32 temps

    tm = _pick_rows(M, bytes_fn)
    Mp, T2 = _plan_split(M, tm)
    if Mp != M:                                             # zero rows: 0 contribution
        nbr = jnp.pad(nbr, ((0, 0), (0, Mp - M), (0, 0)))
        ctr = jnp.pad(ctr, ((0, Mp - M), (0, 0)))

    ymax, s, sq = edge_stats(nbr, ctr, wt, wd, tm, T2)
    cnt = jnp.float32(M * k)
    mean = jnp.sum(s, axis=(0, 1)).reshape(1, C) / cnt
    var = jnp.maximum(jnp.sum(sq, axis=(0, 1)).reshape(1, C) / cnt - mean * mean, 0.0)
    rstd = jax.lax.rsqrt(var + EPS)
    out = bn_act(ymax, rstd, -mean * rstd, tm)              # (Mp, C) f32, elementwise
    return out[:M].reshape(B, N, C)


def conv1d_bn_lrelu(x, w):
    # Conv1d(k=1, bias=False) + BatchNorm1d (train-mode batch stats) + LeakyReLU(0.2).
    B, N, F = x.shape
    C = w.shape[1]
    M = B * N
    x2 = x.reshape(M, F).astype(MXU_DTYPE)
    wb = w.astype(MXU_DTYPE)

    def bytes_fn(tm):
        return (2 * (_blk_bytes((tm, F), 2) + _blk_bytes((tm, C), 2))
                + _blk_bytes((F, C), 2)
                + 4 * _blk_bytes((1, C), 4)
                + 3 * _blk_bytes((tm, C), 4))

    tm = _pick_rows(M, bytes_fn)
    Mp, T2 = _plan_split(M, tm)
    if Mp != M:
        x2 = jnp.pad(x2, ((0, Mp - M), (0, 0)))

    y, s, sq = lin_stats(x2, wb, tm, T2)                    # y bf16 written once
    cnt = jnp.float32(M)
    mean = jnp.sum(s, axis=(0, 1)).reshape(1, C) / cnt
    var = jnp.maximum(jnp.sum(sq, axis=(0, 1)).reshape(1, C) / cnt - mean * mean, 0.0)
    rstd = jax.lax.rsqrt(var + EPS)
    out = bn_act(y, rstd, -mean * rstd, tm)
    return out[:M].reshape(B, N, C)


def conv1d_bias(x, w, b):
    B, N, F = x.shape
    C = w.shape[1]
    M = B * N
    x2 = x.reshape(M, F)

    def bytes_fn(tm):
        return (2 * (_blk_bytes((tm, F), 4) + _blk_bytes((tm, C), 4))
                + _blk_bytes((F, C), 4) + _blk_bytes((1, C), 4)
                + 2 * _blk_bytes((tm, C), 4))

    tm = _pick_rows(M, bytes_fn)
    Mp = _round_up(M, tm)
    if Mp != M:
        x2 = jnp.pad(x2, ((0, Mp - M), (0, 0)))
    out = linear_bias(x2, w, b, tm)
    return out[:M].reshape(B, N, C)


def _conv_weight(key, cin, cout):
    # 1x1 conv weight stored as (Cin, Cout); deterministic kaiming-uniform-ish init.
    bound = 1.0 / jnp.sqrt(jnp.float32(cin))
    return jax.random.uniform(key, (cin, cout), jnp.float32, -bound, bound)


def init_params(key, out_features=3):
    ks = jax.random.split(key, 12)
    p = {}
    # Encoder: EdgeConv(3->64, 64->64, 64->128, 128->256, 256->512)
    p["enc_w0"] = _conv_weight(ks[0], 3 * 2, 64)
    p["enc_w1"] = _conv_weight(ks[1], 64 * 2, 64)
    p["enc_w2"] = _conv_weight(ks[2], 64 * 2, 128)
    p["enc_w3"] = _conv_weight(ks[3], 128 * 2, 256)
    p["enc_w4"] = _conv_weight(ks[4], 256 * 2, 512)
    # Tail: Conv1d(1024->512) + EdgeConv(512->256) + EdgeConv(256->128)
    p["tail_w0"] = _conv_weight(ks[5], 1024, 512)
    p["tail_w1"] = _conv_weight(ks[6], 512 * 2, 256)
    p["tail_w2"] = _conv_weight(ks[7], 256 * 2, 128)
    # Decoder: EdgeConv(256->128) + EdgeConv(128->64) + Conv1d(64->out, bias=True)
    p["dec_w0"] = _conv_weight(ks[8], 256 * 2, 128)
    p["dec_w1"] = _conv_weight(ks[9], 128 * 2, 64)
    p["dec_w2"] = _conv_weight(ks[10], 64, out_features)
    bound = 1.0 / jnp.sqrt(jnp.float32(64))
    p["dec_b2"] = jax.random.uniform(ks[11], (out_features,), jnp.float32, -bound, bound)
    return p


def encoder_fwd(x, p, k):
    x1 = edge_convolution(x, p["enc_w0"], k)
    x2 = edge_convolution(x1, p["enc_w1"], k)
    x3 = edge_convolution(x2, p["enc_w2"], k)
    x4 = edge_convolution(x3, p["enc_w3"], k)
    x5 = edge_convolution(x4, p["enc_w4"], k)
    return jnp.concatenate([x1, x2, x3, x4, x5], axis=-1)       # (B, N, 1024)


def tail_fwd(f, p, k):
    h = conv1d_bn_lrelu(f, p["tail_w0"])
    h = edge_convolution(h, p["tail_w1"], k)
    h = edge_convolution(h, p["tail_w2"], k)
    return h                                                     # (B, N, 128)


def backbone_forward(p, k, *args):
    # args in PyTorch layout (B, C, N); internal channels-last (B, N, C).
    if len(args) == 2:
        x, y = args
        x1 = tail_fwd(encoder_fwd(jnp.transpose(x, (0, 2, 1)), p, k), p, k)
        x2 = tail_fwd(encoder_fwd(jnp.transpose(y, (0, 2, 1)), p, k), p, k)
        h = jnp.concatenate([x1, x2], axis=-1)                   # (B, N, 256)
        h = edge_convolution(h, p["dec_w0"], k)
        h = edge_convolution(h, p["dec_w1"], k)
        h = conv1d_bias(h, p["dec_w2"], p["dec_b2"])             # (B, N, 3)
        return jnp.transpose(h, (0, 2, 1))                       # (B, 3, N) torch layout
    elif len(args) == 1:
        f = encoder_fwd(jnp.transpose(args[0], (0, 2, 1)), p, k)
        return jnp.transpose(f, (0, 2, 1))                       # (B, 1024, N)
    else:
        raise ValueError("Invalid number of arguments.")


if __name__ == "__main__":
    key = jax.random.PRNGKey(0)
    kx, ky, kp = jax.random.split(key, 3)

    B, N, K_NEIGH = 2, 16, 4          # small shapes; k must be <= num points
    x = jax.random.normal(kx, (B, 3, N), jnp.float32)
    y = jax.random.normal(ky, (B, 3, N), jnp.float32)
    params = init_params(kp, out_features=3)

    # Two-argument path: encoder -> tail (x2) -> decoder, returns (B, 3, N).
    matrix = jax.block_until_ready(backbone_forward(params, K_NEIGH, x, y))
    assert matrix.shape == (B, 3, N), matrix.shape
    assert bool(jnp.all(jnp.isfinite(matrix)))

    # One-argument path: encoder features, returns (B, 1024, N).
    feats = jax.block_until_ready(backbone_forward(params, K_NEIGH, x))
    assert feats.shape == (B, 64 + 64 + 128 + 256 + 512, N), feats.shape
    assert bool(jnp.all(jnp.isfinite(feats)))

    print("KERNEL_OK")
</pallas_src>

<mosaic_0001>
module attributes {stable_mosaic.version = 11 : i64} {
  func.func @_pdist_kernel(%arg0: i32, %arg1: i32, %arg2: memref<1x16x3xf32, #tpu.memory_space<vmem>>, %arg3: memref<1x16x3xf32, #tpu.memory_space<vmem>>, %arg4: memref<1x1x16xf32, #tpu.memory_space<vmem>>, %arg5: memref<1x16x16xf32, #tpu.memory_space<vmem>>) attributes {dimension_semantics = [#tpu.dimension_semantics<parallel>, #tpu.dimension_semantics<parallel>], iteration_bounds = array<i64: 2, 1>, scalar_prefetch = 0 : i64, scratch_operands = 0 : i64, tpu.core_type = #tpu.core_type<tc>, window_params = [{transform_indices = @transform_0, window_bounds = array<i64: 1, 16, 3>}, {transform_indices = @transform_1, window_bounds = array<i64: 1, 16, 3>}, {transform_indices = @transform_2, window_bounds = array<i64: 1, 1, 16>}, {transform_indices = @transform_3, window_bounds = array<i64: 1, 16, 16>}]} {
    %c0 = arith.constant 0 : index
    %c0_0 = arith.constant 0 : index
    %c0_1 = arith.constant 0 : index
    %0 = vector.load %arg2[%c0, %c0_0, %c0_1] : memref<1x16x3xf32, #tpu.memory_space<vmem>>, vector<1x16x3xf32>
    %1 = vector.shape_cast %0 : vector<1x16x3xf32> to vector<16x3xf32>
    %c0_2 = arith.constant 0 : index
    %c0_3 = arith.constant 0 : index
    %c0_4 = arith.constant 0 : index
    %2 = vector.load %arg3[%c0_2, %c0_3, %c0_4] : memref<1x16x3xf32, #tpu.memory_space<vmem>>, vector<1x16x3xf32>
    %3 = vector.shape_cast %2 : vector<1x16x3xf32> to vector<16x3xf32>
    %cst = arith.constant dense<0.000000e+00> : vector<16x16xf32>
    %4 = tpu.matmul %1, %3, %cst {dimension_numbers = #tpu.dot_dimension_numbers<[1], [1], [0], [0], [0, 0, 1, 0], [], []>} : vector<16x3xf32>, vector<16x3xf32>, vector<16x16xf32> -> vector<16x16xf32>
    %5 = arith.mulf %1, %1 : vector<16x3xf32>
    %cst_5 = arith.constant dense<0.000000e+00> : vector<16xf32>
    %6 = vector.multi_reduction <add>, %5, %cst_5 [1] : vector<16x3xf32> to vector<16xf32>
    %7 = vector.shape_cast %6 : vector<16xf32> to vector<16x1xf32>
    %cst_6 = arith.constant 2.000000e+00 : f32
    %8 = vector.broadcast %cst_6 : f32 to vector<16x16xf32>
    %9 = arith.mulf %8, %4 : vector<16x16xf32>
    %10 = vector.broadcast %7 : vector<16x1xf32> to vector<16x16xf32>
    %11 = arith.subf %9, %10 : vector<16x16xf32>
    %c0_7 = arith.constant 0 : index
    %c0_8 = arith.constant 0 : index
    %c0_9 = arith.constant 0 : index
    %12 = vector.load %arg4[%c0_7, %c0_8, %c0_9] : memref<1x1x16xf32, #tpu.memory_space<vmem>>, vector<1x1x16xf32>
    %13 = vector.shape_cast %12 : vector<1x1x16xf32> to vector<1x16xf32>
    %14 = vector.broadcast %13 : vector<1x16xf32> to vector<16x16xf32>
    %15 = arith.subf %11, %14 : vector<16x16xf32>
    %c0_10 = arith.constant 0 : index
    %c0_11 = arith.constant 0 : index
    %c0_12 = arith.constant 0 : index
    %16 = vector.load %arg5[%c0_10, %c0_11, %c0_12] : memref<1x16x16xf32, #tpu.memory_space<vmem>>, vector<1x16x16xf32>
    %17 = vector.shape_cast %16 : vector<1x16x16xf32> to vector<16x16xf32>
    %18 = vector.shape_cast %15 : vector<16x16xf32> to vector<1x16x16xf32>
    tpu.vector_store %arg5[%c0_10, %c0_11, %c0_12], %18 {strides = array<i32>} : memref<1x16x16xf32, #tpu.memory_space<vmem>>, vector<1x16x16xf32>,
    return
  }
  func.func @transform_0(%arg0: i32, %arg1: i32) -> (i32, i32, i32) {
    %c0_i32 = arith.constant 0 : i32
    %c0_i32_0 = arith.constant 0 : i32
    return %arg0, %arg1, %c0_i32 : i32, i32, i32
  }
  func.func @transform_1(%arg0: i32, %arg1: i32) -> (i32, i32, i32) {
    %c0_i32 = arith.constant 0 : i32
    %c0_i32_0 = arith.constant 0 : i32
    %c0_i32_1 = arith.constant 0 : i32
    return %arg0, %c0_i32, %c0_i32_0 : i32, i32, i32
  }
  func.func @transform_2(%arg0: i32, %arg1: i32) -> (i32, i32, i32) {
    %c0_i32 = arith.constant 0 : i32
    %c0_i32_0 = arith.constant 0 : i32
    %c0_i32_1 = arith.constant 0 : i32
    return %arg0, %c0_i32, %c0_i32_0 : i32, i32, i32
  }
  func.func @transform_3(%arg0: i32, %arg1: i32) -> (i32, i32, i32) {
    %c0_i32 = arith.constant 0 : i32
    %c0_i32_0 = arith.constant 0 : i32
    return %arg0, %arg1, %c0_i32 : i32, i32, i32
  }
}

</mosaic_0001>

<llo_original>
// kernel: tpu_custom_call.1
$region0: #{tpu_custom_call.1}
  #allocation0 [shape = 'u32[]', space=smem, size = 0x4, offset = 0x4, fixed_abs, tag = 'smem constant byte address 0x4 - core index']
  #allocation1 [shape = 'u32[144,128]{1,0:T(1,128)}', space=vmem, size = 0x12000, scoped, tag = 'internal scratch']
  %s0 = inlined_call_operand.vmem [shape: f32[2,16,3], index: 0, kind: input, shape index: {}]
  %s1 = inlined_call_operand.vmem [shape: f32[2,16,3], index: 1, kind: input, shape index: {}]
  %s2 = inlined_call_operand.vmem [shape: f32[2,1,16], index: 2, kind: input, shape index: {}]
  %s3 = inlined_call_operand.hbm [shape: f32[2,16,16], index: 3, kind: output, shape index: {}]
  %s4 = sld [smem:[#allocation0]]
  $region45: #{tpu_custom_call.1} parent=0
    _
  %s6 = ssub.s32 1, %s4
  %s7 = scalar_select 0, %s6, %s4
  $region1: #{tpu_custom_call.1} parent=0
    #allocation2 [shape = 'u8[16384]{0}', space=vmem, size = 0x4000, scoped, tag = 'output window, operand 0']
    #allocation3 [shape = 's32[2]{0}', space=sflag, size = 0x8, scoped, tag = 'scoped memory for tpu_custom_call.1']
    %8 = vsyncpa [#allocation3], 0
    %s9 = scalar_lea.sflag [#allocation3], 1
    %10 = vsyncpa %s9, 0
    loop: start=0, step=1, limit=4
    $region2: #{tpu_custom_call.1} parent=1 // loop_pre_header
      _
    $region3: #{tpu_custom_call.1} parent=1 // loop_header
      %s12 = sphi 0, %s16
      %p13 = scmp.ge.s32.totalorder %s12, 4
      %s19 = sphi 0, %s31
      %s20 = sphi 0, %s27
      %s21 = sphi 0, %s19
      %s22 = sphi 0, %s20
      %s23 = sphi 0, %s21
      %s24 = sphi 0, %s22
      %s36 = sphi 0, %s38
      %s39 = sphi 0, %s36
      %s40 = sphi 0, %s39
      %s56 = sphi 0, %s40
      %s62 = sphi 0, %s64
      %s65 = sphi 0, %s62
      %s66 = sphi 0, %s65
      %s82 = sphi 0, %s66
      %s88 = sphi 0, %s90
      %s91 = sphi 0, %s88
      %s92 = sphi 0, %s91
      %s108 = sphi 0, %s92
      %s116 = sphi 0, %s118
      %s119 = sphi 0, %s116
      %s120 = sphi 0, %s119
      %s136 = sphi 0, %s120
    $region4: #{tpu_custom_call.1} parent=1 // loop_header_branch
      %15 = sbr.rel (%p13) target = $region8
    $region5: #{tpu_custom_call.1} parent=1 // loop_body
      %s17 = ssub.s32 %s12, 1
      %s18 = ssub.s32 %s12, 2
      %s25 = sadd.s32 1, %s20
      %p26 = scmp.ge.s32.totalorder %s25, 1
      %s27 = scalar_select %p26, 0, %s25
      %s28 = sadd.s32 1, %s19
      %s29 = scalar_select %p26, %s28, %s19
      %p30 = scmp.ge.s32.totalorder %s29, 2
      %s31 = scalar_select %p30, 0, %s29
      %s32 = ssub.s32 %s19, %s31
      %s33 = ssub.s32 %s20, %s27
      %s34 = sor.u32 %s32, %s33
      %p35 = scmp.eq.s32.totalorder %s34, 0
      %s37 = sadd.s32 %s36, 1
      %s38 = scalar_select %p35, %s36, %s37
      %p41 = pneg %p35
      %p42 = scmp.eq.s32.totalorder %s12, 1
      %p43 = por %p41, %p42
      %p44 = scmp.ne.s32.totalorder %s36, %s39
      %p45 = scmp.eq.s32.totalorder %s12, 0
      %p46 = por %p44, %p45
      %p47 = scmp.ne.s32.totalorder %s36, %s39
      %p48 = scmp.eq.s32.totalorder %s17, 1
      %p49 = por %p47, %p48
      %p50 = scmp.ne.s32.totalorder %s39, %s40
      %p51 = scmp.eq.s32.totalorder %s17, 0
      %p52 = por %p50, %p51
      %p53 = scmp.ne.s32.totalorder %s39, %s40
      %p54 = scmp.eq.s32.totalorder %s18, 1
      %p55 = por %p53, %p54
      %p57 = scmp.ne.s32.totalorder %s40, %s56
      %p58 = scmp.eq.s32.totalorder %s18, 0
      %p59 = por %p57, %p58
      %s60 = ssub.s32 %s19, %s31
      %p61 = scmp.eq.s32.totalorder %s60, 0
      %s63 = sadd.s32 %s62, 1
      %s64 = scalar_select %p61, %s62, %s63
      %p67 = pneg %p61
      %p68 = scmp.eq.s32.totalorder %s12, 1
      %p69 = por %p67, %p68
      %p70 = scmp.ne.s32.totalorder %s62, %s65
      %p71 = scmp.eq.s32.totalorder %s12, 0
      %p72 = por %p70, %p71
      %p73 = scmp.ne.s32.totalorder %s62, %s65
      %p74 = scmp.eq.s32.totalorder %s17, 1
      %p75 = por %p73, %p74
      %p76 = scmp.ne.s32.totalorder %s65, %s66
      %p77 = scmp.eq.s32.totalorder %s17, 0
      %p78 = por %p76, %p77
      %p79 = scmp.ne.s32.totalorder %s65, %s66
      %p80 = scmp.eq.s32.totalorder %s18, 1
      %p81 = por %p79, %p80
      %p83 = scmp.ne.s32.totalorder %s66, %s82
      %p84 = scmp.eq.s32.totalorder %s18, 0
      %p85 = por %p83, %p84
      %s86 = ssub.s32 %s19, %s31
      %p87 = scmp.eq.s32.totalorder %s86, 0
      %s89 = sadd.s32 %s88, 1
      %s90 = scalar_select %p87, %s88, %s89
      %p93 = pneg %p87
      %p94 = scmp.eq.s32.totalorder %s12, 1
      %p95 = por %p93, %p94
      %p96 = scmp.ne.s32.totalorder %s88, %s91
      %p97 = scmp.eq.s32.totalorder %s12, 0
      %p98 = por %p96, %p97
      %p99 = scmp.ne.s32.totalorder %s88, %s91
      %p100 = scmp.eq.s32.totalorder %s17, 1
      %p101 = por %p99, %p100
      %p102 = scmp.ne.s32.totalorder %s91, %s92
      %p103 = scmp.eq.s32.totalorder %s17, 0
      %p104 = por %p102, %p103
      %p105 = scmp.ne.s32.totalorder %s91, %s92
      %p106 = scmp.eq.s32.totalorder %s18, 1
      %p107 = por %p105, %p106
      %p109 = scmp.ne.s32.totalorder %s92, %s108
      %p110 = scmp.eq.s32.totalorder %s18, 0
      %p111 = por %p109, %p110
      %s112 = ssub.s32 %s19, %s31
      %s113 = ssub.s32 %s20, %s27
      %s114 = sor.u32 %s112, %s113
      %p115 = scmp.eq.s32.totalorder %s114, 0
      %s117 = sadd.s32 %s116, 1
      %s118 = scalar_select %p115, %s116, %s117
      %p121 = pneg %p115
      %p122 = scmp.eq.s32.totalorder %s12, 1
      %p123 = por %p121, %p122
      %p124 = scmp.ne.s32.totalorder %s116, %s119
      %p125 = scmp.eq.s32.totalorder %s12, 0
      %p126 = por %p124, %p125
      %p127 = scmp.ne.s32.totalorder %s116, %s119
      %p128 = scmp.eq.s32.totalorder %s17, 1
      %p129 = por %p127, %p128
      %p130 = scmp.ne.s32.totalorder %s119, %s120
      %p131 = scmp.eq.s32.totalorder %s17, 0
      %p132 = por %p130, %p131
      %p133 = scmp.ne.s32.totalorder %s119, %s120
      %p134 = scmp.eq.s32.totalorder %s18, 1
      %p135 = por %p133, %p134
      %p137 = scmp.ne.s32.totalorder %s120, %s136
      %p138 = scmp.eq.s32.totalorder %s18, 0
      %p139 = por %p137, %p138
      %p140 = scmp.le.s32.totalorder 1, %s12
      %p141 = scmp.lt.s32.totalorder %s12, 3
      %p142 = pnand %p140, %p141
      %p143 = pneg %p142
      // Predicated region
      $region9: #{tpu_custom_call.1} parent=5 // pred_check
        _
      $region10: #{tpu_custom_call.1} parent=5 // pred_check_branch
        %145 = sbr.rel (%p142) target = $region12
      $region11: #{tpu_custom_call.1} parent=5 // pred_region
        %s146 = ssub.s32 %s12, 1
      $region12: #{tpu_custom_call.1} parent=5 // pred_fallthru
        _
      %p147 = scmp.lt.s32.totalorder %s12, 2
      // Predicated region
      $region13: #{tpu_custom_call.1} parent=5 // pred_check
        %p148 = pneg %p147
      $region14: #{tpu_custom_call.1} parent=5 // pred_check_branch
        %150 = sbr.rel (%p148) target = $region16
      $region15: #{tpu_custom_call.1} parent=5 // pred_region
        // Predicated region
        $region17: #{tpu_custom_call.1} parent=15 // pred_check
          %p151 = pneg %p46
        $region18: #{tpu_custom_call.1} parent=15 // pred_check_branch
          %153 = sbr.rel (%p151) target = $region20
        $region19: #{tpu_custom_call.1} parent=15 // pred_region
          %s154 = smul.u32 2, %s20
          %p155 = scmp.lt.s32.totalorder %s19, 1
          %s156 = scalar_select %p155, %s19, 1
          %p157 = scmp.lt.s32.totalorder %s154, 1
          %s158 = scalar_select %p157, %s154, 1
          %s159 = smul.addr %s156, 2
          %s160 = sadd.s32 %s158, %s159
          %s161 = smul.addr %s160, 8
          %s162 = scalar_lea.vmem %s0, %s161
          %s163 = smul.u32 2, %s20
        $region20: #{tpu_custom_call.1} parent=15 // pred_fallthru
          _
        // Predicated region
        $region21: #{tpu_custom_call.1} parent=15 // pred_check
          %p164 = pneg %p72
        $region22: #{tpu_custom_call.1} parent=15 // pred_check_branch
          %166 = sbr.rel (%p164) target = $region24
        $region23: #{tpu_custom_call.1} parent=15 // pred_region
          %p167 = scmp.lt.s32.totalorder %s19, 1
          %s168 = scalar_select %p167, %s19, 1
          %s169 = smul.addr %s168, 2
          %s170 = smul.addr %s169, 8
          %s171 = scalar_lea.vmem %s1, %s170
        $region24: #{tpu_custom_call.1} parent=15 // pred_fallthru
          _
        // Predicated region
        $region25: #{tpu_custom_call.1} parent=15 // pred_check
          %p172 = pneg %p98
        $region26: #{tpu_custom_call.1} parent=15 // pred_check_branch
          %174 = sbr.rel (%p172) target = $region28
        $region27: #{tpu_custom_call.1} parent=15 // pred_region
          %p175 = scmp.lt.s32.totalorder %s19, 1
          %s176 = scalar_select %p175, %s19, 1
          %s177 = scalar_lea.vmem %s2, %s176
        $region28: #{tpu_custom_call.1} parent=15 // pred_fallthru
          _
      $region16: #{tpu_custom_call.1} parent=5 // pred_fallthru
        _
      %p178 = scmp.le.s32.totalorder 1, %s12
      %p179 = scmp.lt.s32.totalorder %s12, 3
      %p180 = pnand %p178, %p179
      %p181 = pneg %p180
      // Predicated region
      $region29: #{tpu_custom_call.1} parent=5 // pred_check
        _
      $region30: #{tpu_custom_call.1} parent=5 // pred_check_branch
        %183 = sbr.rel (%p180) target = $region32
      $region31: #{tpu_custom_call.1} parent=5 // pred_region
        %s184 = ssub.s32 %s12, 1
        %s185 = smul.u32 2, %s22
        %p186 = scmp.lt.s32.totalorder %s21, 1
        %s187 = scalar_select %p186, %s21, 1
        %p188 = scmp.lt.s32.totalorder %s185, 1
        %s189 = scalar_select %p188, %s185, 1
        %s190 = smul.addr %s187, 2
        %s191 = sadd.s32 %s189, %s190
        %s192 = smul.addr %s191, 8
        %s193 = scalar_lea.vmem %s0, %s192
        %p194 = pneg %p52
        %p195 = pneg %p49
        %p196 = scmp.lt.s32.totalorder %s21, 1
        %s197 = scalar_select %p196, %s21, 1
        %s198 = smul.addr %s197, 2
        %s199 = smul.addr %s198, 8
        %s200 = scalar_lea.vmem %s1, %s199
        %p201 = pneg %p78
        %p202 = pneg %p75
        %p203 = scmp.lt.s32.totalorder %s21, 1
        %s204 = scalar_select %p203, %s21, 1
        %s205 = scalar_lea.vmem %s2, %s204
        %p206 = pneg %p104
        %p207 = pneg %p101
        %p208 = pneg %p132
        %p209 = pneg %p129
        %s210 = sand.u32 %s119, 1
        %s211 = scalar_lea.sflag [#allocation3], %s210
        %s212 = sand.u32 %s119, 1
        %s213 = smul.addr %s212, 16
        %s214 = scalar_lea.vmem [#allocation2], %s213
        %s215 = smul.u32 2, %s22
        %p216 = scmp.lt.s32.totalorder %s21, 1
        %s217 = scalar_select %p216, %s21, 1
        %p218 = scmp.lt.s32.totalorder %s215, 1
        %s219 = scalar_select %p218, %s215, 1
        %s220 = smul.addr %s217, 2
        %s221 = sadd.s32 %s219, %s220
        %s222 = smul.addr %s221, 8
        %s223 = scalar_lea.vmem %s0, %s222
        %s224 = smul.u32 2, %s22
        %p225 = scmp.lt.s32.totalorder %s21, 1
        %s226 = scalar_select %p225, %s21, 1
        %s227 = smul.addr %s226, 2
        %s228 = smul.addr %s227, 8
        %s229 = scalar_lea.vmem %s1, %s228
        %p230 = scmp.lt.s32.totalorder %s21, 1
        %s231 = scalar_select %p230, %s21, 1
        %s232 = scalar_lea.vmem %s2, %s231
        %s233 = smul.u32 2, %s22
        %v234 = vld [vmem:[%s223] sm:$0xff]
        %v235 = vld [vmem:[%s223 + $0x8] sm:$0xff]
        %v236 = vld [vmem:[%s229] sm:$0xff]
        %v237 = vld [vmem:[%s229 + $0x8] sm:$0xff]
        %vm238 = vcmask 23552
        %v240 = vsel %vm238, %v234, 0
        %v243 = vsel %vm238, %v235, 0
        %v246 = vsel %vm238, %v236, 0
        %v249 = vsel %vm238, %v237, 0
        %251 = vmatprep.subr.mxu0 0.0
        %252 = vmatpush1.xpose.msra.mxu0 0.0
        %253 = vmatprep.subr.mxu0 0.0
        %254 = vmatpush1.xpose.msra.mxu0 0.0
        %255 = vmatprep.subr.mxu0 0.0
        %256 = vmatpush1.xpose.msra.mxu0 0.0
        %257 = vmatprep.subr.mxu0 0.0
        %258 = vmatpush1.xpose.msra.mxu0 0.0
        %259 = vmatprep.subr.mxu0 0.0
        %260 = vmatpush1.xpose.msra.mxu0 0.0
        %261 = vmatprep.subr.mxu0 0.0
        %262 = vmatpush1.xpose.msra.mxu0 0.0
        %263 = vmatprep.subr.mxu0 0.0
        %264 = vmatpush1.xpose.msra.mxu0 0.0
        %265 = vmatprep.subr.mxu0 0.0
        %266 = vmatpush1.xpose.msra.mxu0 0.0
        %267 = vmatprep.subr.mxu0 0.0
        %268 = vmatpush1.xpose.msra.mxu0 0.0
        %269 = vmatprep.subr.mxu0 0.0
        %270 = vmatpush1.xpose.msra.mxu0 0.0
        %271 = vmatprep.subr.mxu0 0.0
        %272 = vmatpush1.xpose.msra.mxu0 0.0
        %273 = vmatprep.subr.mxu0 0.0
        %274 = vmatpush1.xpose.msra.mxu0 0.0
        %275 = vmatprep.subr.mxu0 0.0
        %276 = vmatpush1.xpose.msra.mxu0 0.0
        %277 = vmatprep.subr.mxu0 0.0
        %278 = vmatpush1.xpose.msra.mxu0 0.0
        %279 = vmatprep.subr.mxu0 0.0
        %280 = vmatpush1.xpose.msra.mxu0 %v249
        %281 = vmatprep.subr.mxu0 0.0
        %282 = vmatpush1.xpose.msra.mxu0 %v246
        %283 = vmatprep.subr.mxu0 0.0
        %284 = vmatpush2.xpose.msra.mxu0 0.0
        %285 = vmatprep.subr.mxu0 0.0
        %286 = vmatpush2.xpose.msra.mxu0 0.0
        %287 = vmatprep.subr.mxu0 0.0
        %288 = vmatpush2.xpose.msra.mxu0 0.0
        %289 = vmatprep.subr.mxu0 0.0
        %290 = vmatpush2.xpose.msra.mxu0 0.0
        %291 = vmatprep.subr.mxu0 0.0
        %292 = vmatpush2.xpose.msra.mxu0 0.0
        %293 = vmatprep.subr.mxu0 0.0
        %294 = vmatpush2.xpose.msra.mxu0 0.0
        %295 = vmatprep.subr.mxu0 0.0
        %296 = vmatpush2.xpose.msra.mxu0 0.0
        %297 = vmatprep.subr.mxu0 0.0
        %298 = vmatpush2.xpose.msra.mxu0 0.0
        %299 = vmatprep.subr.mxu0 0.0
        %300 = vmatpush2.xpose.msra.mxu0 0.0
        %301 = vmatprep.subr.mxu0 0.0
        %302 = vmatpush2.xpose.msra.mxu0 0.0
        %303 = vmatprep.subr.mxu0 0.0
        %304 = vmatpush2.xpose.msra.mxu0 0.0
        %305 = vmatprep.subr.mxu0 0.0
        %306 = vmatpush2.xpose.msra.mxu0 0.0
        %307 = vmatprep.subr.mxu0 0.0
        %308 = vmatpush2.xpose.msra.mxu0 0.0
        %309 = vmatprep.subr.mxu0 0.0
        %310 = vmatpush2.xpose.msra.mxu0 0.0
        %311 = vmatprep.subr.mxu0 0.0
        %312 = vmatpush2.xpose.msra.mxu0 0.0
        %313 = vmatprep.subr.mxu0 0.0
        %314 = vmatpush2.xpose.msra.mxu0 0.0
        %315 = vmatprep.mubr.f32.mxu0 0.0
        %316 = vmatmul.mubr.f32.gmra.mxu0 %v240
        %v317 = vpop.f32.mrf.mxu0
        %v318 = vadd.f32 0.0, %v317
        %v319 = vpop.f32.mrf.mxu0
        %320 = vmatprep.mubr.f32.mxu0 0.0
        %321 = vmatmul.mubr.f32.gmra.mxu0 %v243
        %v322 = vpop.f32.mrf.mxu0
        %v323 = vadd.f32 0.0, %v322
        %v324 = vpop.f32.mrf.mxu0
        %325 = vdwg.mxu0
        %v326 = vmul.f32 %v234, %v234
        %v327 = vmul.f32 %v235, %v235
        %v328 = vsel %vm238, %v326, 0.0
        %329 = vadd.xlane.f32.xlu0 %v328
        %v330 = vpop.xlane.xlu0 %329
        %v331 = vsel %vm238, %v327, 0.0
        %332 = vadd.xlane.f32.xlu0 %v331
        %v333 = vpop.xlane.xlu0 %332
        %v334 = vmul.f32 %v318, 2.0
        %v335 = vmul.f32 %v323, 2.0
        %v336 = vsub.f32 %v334, %v330
        %v337 = vsub.f32 %v335, %v333
        %v338 = vld [vmem:[%s232] sm:$0x1]
        %v340 = vlaneseq
        %v341 = vshrl.u32 %v340, 7
        %v342 = vsub.s32 0, %v341
        %v343 = vrot.slane %v338, %v342
        %v345 = vsub.f32 %v336, %v343
        %v346 = vsub.f32 %v337, %v343
        %vm347 = vcmask 130048
        %348 = vst.msk [vmem:[%s214] sm:$0xff] %vm347, %v345
        %349 = vst.msk [vmem:[%s214 + $0x8] sm:$0xff] %vm347, %v346
        %s350 = sand.u32 %s119, 1
        %s351 = scalar_lea.sflag [#allocation3], %s350
        %s352 = sand.u32 %s119, 1
        %s353 = smul.addr %s352, 16
        %s354 = scalar_lea.vmem [#allocation2], %s353
        // Predicated region
        $region33: #{tpu_custom_call.1} parent=31 // pred_check
          %p355 = pneg %p129
        $region34: #{tpu_custom_call.1} parent=31 // pred_check_branch
          %357 = sbr.rel (%p355) target = $region36
        $region35: #{tpu_custom_call.1} parent=31 // pred_region
          %s358 = smul.u32 2, %s22
          %s360 = ssub.s32 256, 256
          %361 = vsyncadd %s351, %s360
          %s362 = smul.addr %s21, 2
          %s363 = sadd.s32 %s358, %s362
          %s364 = smul.addr %s363, 128
          %s365 = scalar_lea.hbm %s3, %s364
          %s366 = sshll.u32 %s354, 4
          %s367 = int_to_ptr.vmem [resolvable:$true] %s366
          %372 = dma.vmem_to_hbm [thread:$0]  %s367, 256, %s365, %s351, 128, 128, 8
        $region36: #{tpu_custom_call.1} parent=31 // pred_fallthru
          _
      $region32: #{tpu_custom_call.1} parent=5 // pred_fallthru
        _
      %p373 = scmp.le.s32.totalorder 2, %s12
      // Predicated region
      $region37: #{tpu_custom_call.1} parent=5 // pred_check
        %p374 = pneg %p373
      $region38: #{tpu_custom_call.1} parent=5 // pred_check_branch
        %376 = sbr.rel (%p374) target = $region40
      $region39: #{tpu_custom_call.1} parent=5 // pred_region
        %s377 = ssub.s32 %s12, 2
        // Predicated region
        $region41: #{tpu_custom_call.1} parent=39 // pred_check
          %p378 = pneg %p135
        $region42: #{tpu_custom_call.1} parent=39 // pred_check_branch
          %380 = sbr.rel (%p378) target = $region44
        $region43: #{tpu_custom_call.1} parent=39 // pred_region
          %s381 = sand.u32 %s120, 1
          %s382 = scalar_lea.sflag [#allocation3], %s381
          %s383 = sand.u32 %s120, 1
          %s384 = smul.addr %s383, 16
          %s385 = scalar_lea.vmem [#allocation2], %s384
          %386 = dma.done %s382, 256
        $region44: #{tpu_custom_call.1} parent=39 // pred_fallthru
          _
      $region40: #{tpu_custom_call.1} parent=5 // pred_fallthru
        _
    $region6: #{tpu_custom_call.1} parent=1 // loop_footer
      %s16 = sadd.s32 1, %s12
    $region7: #{tpu_custom_call.1} parent=1 // loop_footer_branch
      %11 = sbr.rel target = $region3
    $region8: #{tpu_custom_call.1} parent=1 // loop_exit
      _
    %387 = vsyncpa [#allocation3], 1
    %s388 = scalar_lea.sflag [#allocation3], 1
    %389 = vsyncpa %s388, 1

</llo_original>
